<compile_context>
chip_gen: v7x
topology: tpu7x:2x2x1
jax: 0.10.0
libtpu: 0.0.40
codegen_flags: <defaults>
</compile_context>

<pallas_src>
import jax
import jax.numpy as jnp
from jax.experimental import pallas as pl
from jax.experimental.pallas import tpu as pltpu

SUBLANE = 8


def mlp_kernel(x_ref, w1_ref, b1_ref, w2_ref, b2_ref, w3_ref, b3_ref, o_ref):
    # Layer 1: bf16 MXU operands, f32 accumulation; bias + ReLU in f32.
    h1 = jnp.dot(x_ref[...].astype(jnp.bfloat16), w1_ref[...],
                 preferred_element_type=jnp.float32)
    h1 = jnp.maximum(h1 + b1_ref[...], 0.0)
    # Layer 2.
    h2 = jnp.dot(h1.astype(jnp.bfloat16), w2_ref[...],
                 preferred_element_type=jnp.float32)
    h2 = jnp.maximum(h2 + b2_ref[...], 0.0)
    # 1-wide head: elementwise mul against the (1, h2) weight row, then a
    # cross-lane reduce (XLU).  Output stays (tb, 1) -> minimal HBM writeback.
    z = jnp.sum(h2 * w3_ref[...], axis=-1, keepdims=True) + b3_ref[...]
    o_ref[...] = jax.nn.sigmoid(z)


def _round_up(v, m):
    return (v + m - 1) // m * m


def mlp_forward(x, w1, b1, w2, b2, w3, b3, *, max_block_rows=1024):
    """x: [B, in_f] f32; wK: [in_k, out_k] (pre-transposed vs PyTorch); bK: [1, out_k]."""
    B, in_f = x.shape
    h1f = w1.shape[1]
    h2f = w2.shape[1]

    # Head weights as a (1, h2) row for the in-kernel broadcast-multiply.
    w3_row = w3.reshape(1, h2f)
    b3_sc = b3.reshape(1, 1)

    # Batch tile: as large as allowed (amortizes ~0.35us/grid-step), multiple of 8.
    tb = min(max_block_rows, _round_up(B, SUBLANE))
    tb = _round_up(tb, SUBLANE)
    b_pad = _round_up(B, tb)
    if b_pad != B:
        x = jnp.pad(x, ((0, b_pad - B), (0, 0)))

    # Weights are tiny (<1 KiB); cast once to bf16 for the MXU path.
    w1b = w1.astype(jnp.bfloat16)
    w2b = w2.astype(jnp.bfloat16)

    grid = (b_pad // tb,)
    out = pl.pallas_call(
        mlp_kernel,
        out_shape=jax.ShapeDtypeStruct((b_pad, 1), jnp.float32),
        grid=grid,
        in_specs=[
            pl.BlockSpec((tb, in_f), lambda i: (i, 0)),    # x tile (pipelined)
            pl.BlockSpec((in_f, h1f), lambda i: (0, 0)),   # weights stay resident
            pl.BlockSpec((1, h1f), lambda i: (0, 0)),
            pl.BlockSpec((h1f, h2f), lambda i: (0, 0)),
            pl.BlockSpec((1, h2f), lambda i: (0, 0)),
            pl.BlockSpec((1, h2f), lambda i: (0, 0)),      # head weight row
            pl.BlockSpec((1, 1), lambda i: (0, 0)),        # head bias
        ],
        out_specs=pl.BlockSpec((tb, 1), lambda i: (i, 0)),
        compiler_params=pltpu.CompilerParams(
            dimension_semantics=("parallel",)),
    )(x, w1b, b1, w2b, b2, w3_row, b3_sc)

    return out[:B]


def init_linear(key, in_f, out_f):
    """Deterministic init mimicking nn.Linear (uniform +-1/sqrt(in_f))."""
    kw, kb = jax.random.split(key)
    bound = 1.0 / jnp.sqrt(float(in_f))
    # Stored as [in, out] (transpose of PyTorch's [out, in]) so the kernel does x @ W.
    w = jax.random.uniform(kw, (in_f, out_f), jnp.float32, -bound, bound)
    b = jax.random.uniform(kb, (1, out_f), jnp.float32, -bound, bound)
    return w, b


if __name__ == "__main__":
    in_features, h1, h2 = 8, 12, 16
    batch = 64

    key = jax.random.PRNGKey(0)
    kx, k1, k2, k3 = jax.random.split(key, 4)

    x = jax.random.normal(kx, (batch, in_features), jnp.float32)
    w1, b1 = init_linear(k1, in_features, h1)
    w2, b2 = init_linear(k2, h1, h2)
    w3, b3 = init_linear(k3, h2, 1)

    # Multi-step pipelined grid (grid=(4,)) and single-step (large tile) paths.
    out_multi = mlp_forward(x, w1, b1, w2, b2, w3, b3, max_block_rows=16)
    out_single = mlp_forward(x, w1, b1, w2, b2, w3, b3)
    jax.block_until_ready(out_multi)
    jax.block_until_ready(out_single)

    # Ragged batch (exercises the row-padding path).
    x_ragged = x[:50]
    out_ragged = mlp_forward(x_ragged, w1, b1, w2, b2, w3, b3)
    jax.block_until_ready(out_ragged)

    # Pure-f32 JAX reference (same math as the PyTorch forward).
    def ref_fn(xi):
        r = jax.nn.relu(xi @ w1 + b1)
        r = jax.nn.relu(r @ w2 + b2)
        return jax.nn.sigmoid(r @ w3 + b3)

    ref = ref_fn(x)
    ref_ragged = ref_fn(x_ragged)

    assert out_multi.shape == (batch, 1)
    assert out_single.shape == (batch, 1)
    assert out_ragged.shape == (50, 1)
    # bf16 matmul operands -> small numerical drift vs the pure-f32 reference.
    assert jnp.allclose(out_multi, ref, atol=2e-2), "multi-tile mismatch vs reference"
    assert jnp.allclose(out_single, ref, atol=2e-2), "single-tile mismatch vs reference"
    assert jnp.allclose(out_ragged, ref_ragged, atol=2e-2), "ragged-batch mismatch"
    # Different tilings of the same input must agree.
    assert jnp.allclose(out_multi, out_single, atol=1e-6), "tiling-dependent result"

    print("KERNEL_OK")
</pallas_src>

<mosaic_0001>
module attributes {stable_mosaic.version = 11 : i64} {
  func.func @mlp_kernel(%arg0: i32, %arg1: memref<16x8xf32, #tpu.memory_space<vmem>>, %arg2: memref<8x12xbf16, #tpu.memory_space<vmem>>, %arg3: memref<1x12xf32, #tpu.memory_space<vmem>>, %arg4: memref<12x16xbf16, #tpu.memory_space<vmem>>, %arg5: memref<1x16xf32, #tpu.memory_space<vmem>>, %arg6: memref<1x16xf32, #tpu.memory_space<vmem>>, %arg7: memref<1x1xf32, #tpu.memory_space<vmem>>, %arg8: memref<16x1xf32, #tpu.memory_space<vmem>>) attributes {dimension_semantics = [#tpu.dimension_semantics<parallel>], iteration_bounds = array<i64: 4>, scalar_prefetch = 0 : i64, scratch_operands = 0 : i64, tpu.core_type = #tpu.core_type<tc>, window_params = [{transform_indices = @transform_0, window_bounds = array<i64: 16, 8>}, {pipeline_mode = #tpu.pipeline_mode<synchronous>, transform_indices = @transform_1, window_bounds = array<i64: 8, 12>}, {pipeline_mode = #tpu.pipeline_mode<synchronous>, transform_indices = @transform_2, window_bounds = array<i64: 1, 12>}, {pipeline_mode = #tpu.pipeline_mode<synchronous>, transform_indices = @transform_3, window_bounds = array<i64: 12, 16>}, {pipeline_mode = #tpu.pipeline_mode<synchronous>, transform_indices = @transform_4, window_bounds = array<i64: 1, 16>}, {pipeline_mode = #tpu.pipeline_mode<synchronous>, transform_indices = @transform_5, window_bounds = array<i64: 1, 16>}, {pipeline_mode = #tpu.pipeline_mode<synchronous>, transform_indices = @transform_6, window_bounds = array<i64: 1, 1>}, {transform_indices = @transform_7, window_bounds = array<i64: 16, 1>}]} {
    %c0 = arith.constant 0 : index
    %c0_0 = arith.constant 0 : index
    %0 = vector.load %arg1[%c0, %c0_0] : memref<16x8xf32, #tpu.memory_space<vmem>>, vector<16x8xf32>
    %1 = arith.truncf %0 : vector<16x8xf32> to vector<16x8xbf16>
    %c0_1 = arith.constant 0 : index
    %c0_2 = arith.constant 0 : index
    %2 = vector.load %arg2[%c0_1, %c0_2] : memref<8x12xbf16, #tpu.memory_space<vmem>>, vector<8x12xbf16>
    %cst = arith.constant dense<0.000000e+00> : vector<16x12xf32>
    %3 = tpu.matmul %1, %2, %cst {dimension_numbers = #tpu.dot_dimension_numbers<[1], [0], [0], [1], [0, 0, 1, 1], [], []>} : vector<16x8xbf16>, vector<8x12xbf16>, vector<16x12xf32> -> vector<16x12xf32>
    %c0_3 = arith.constant 0 : index
    %c0_4 = arith.constant 0 : index
    %4 = vector.load %arg3[%c0_3, %c0_4] : memref<1x12xf32, #tpu.memory_space<vmem>>, vector<1x12xf32>
    %5 = vector.broadcast %4 : vector<1x12xf32> to vector<16x12xf32>
    %6 = arith.addf %3, %5 : vector<16x12xf32>
    %cst_5 = arith.constant 0.000000e+00 : f32
    %7 = vector.broadcast %cst_5 : f32 to vector<16x12xf32>
    %8 = arith.maximumf %6, %7 : vector<16x12xf32>
    %9 = arith.truncf %8 : vector<16x12xf32> to vector<16x12xbf16>
    %c0_6 = arith.constant 0 : index
    %c0_7 = arith.constant 0 : index
    %10 = vector.load %arg4[%c0_6, %c0_7] : memref<12x16xbf16, #tpu.memory_space<vmem>>, vector<12x16xbf16>
    %cst_8 = arith.constant dense<0.000000e+00> : vector<16x16xf32>
    %11 = tpu.matmul %9, %10, %cst_8 {dimension_numbers = #tpu.dot_dimension_numbers<[1], [0], [0], [1], [0, 0, 1, 1], [], []>} : vector<16x12xbf16>, vector<12x16xbf16>, vector<16x16xf32> -> vector<16x16xf32>
    %c0_9 = arith.constant 0 : index
    %c0_10 = arith.constant 0 : index
    %12 = vector.load %arg5[%c0_9, %c0_10] : memref<1x16xf32, #tpu.memory_space<vmem>>, vector<1x16xf32>
    %13 = vector.broadcast %12 : vector<1x16xf32> to vector<16x16xf32>
    %14 = arith.addf %11, %13 : vector<16x16xf32>
    %cst_11 = arith.constant 0.000000e+00 : f32
    %15 = vector.broadcast %cst_11 : f32 to vector<16x16xf32>
    %16 = arith.maximumf %14, %15 : vector<16x16xf32>
    %c0_12 = arith.constant 0 : index
    %c0_13 = arith.constant 0 : index
    %17 = vector.load %arg6[%c0_12, %c0_13] : memref<1x16xf32, #tpu.memory_space<vmem>>, vector<1x16xf32>
    %18 = vector.broadcast %17 : vector<1x16xf32> to vector<16x16xf32>
    %19 = arith.mulf %16, %18 : vector<16x16xf32>
    %cst_14 = arith.constant dense<0.000000e+00> : vector<16xf32>
    %20 = vector.multi_reduction <add>, %19, %cst_14 [1] : vector<16x16xf32> to vector<16xf32>
    %21 = vector.shape_cast %20 : vector<16xf32> to vector<16x1xf32>
    %c0_15 = arith.constant 0 : index
    %c0_16 = arith.constant 0 : index
    %22 = vector.load %arg7[%c0_15, %c0_16] : memref<1x1xf32, #tpu.memory_space<vmem>>, vector<1x1xf32>
    %23 = vector.broadcast %22 : vector<1x1xf32> to vector<16x1xf32>
    %24 = arith.addf %21, %23 : vector<16x1xf32>
    %25 = arith.negf %24 : vector<16x1xf32>
    %26 = math.exp %25 : vector<16x1xf32>
    %cst_17 = arith.constant 1.000000e+00 : f32
    %27 = vector.broadcast %cst_17 : f32 to vector<16x1xf32>
    %28 = arith.addf %27, %26 : vector<16x1xf32>
    %29 = arith.divf %27, %28 : vector<16x1xf32>
    %c0_18 = arith.constant 0 : index
    %c0_19 = arith.constant 0 : index
    %30 = vector.load %arg8[%c0_18, %c0_19] : memref<16x1xf32, #tpu.memory_space<vmem>>, vector<16x1xf32>
    tpu.vector_store %arg8[%c0_18, %c0_19], %29 {strides = array<i32>} : memref<16x1xf32, #tpu.memory_space<vmem>>, vector<16x1xf32>,
    return
  }
  func.func @transform_0(%arg0: i32) -> (i32, i32) {
    %c0_i32 = arith.constant 0 : i32
    %c0_i32_0 = arith.constant 0 : i32
    return %arg0, %c0_i32 : i32, i32
  }
  func.func @transform_1(%arg0: i32) -> (i32, i32) {
    %c0_i32 = arith.constant 0 : i32
    %c0_i32_0 = arith.constant 0 : i32
    %c0_i32_1 = arith.constant 0 : i32
    return %c0_i32, %c0_i32_0 : i32, i32
  }
  func.func @transform_2(%arg0: i32) -> (i32, i32) {
    %c0_i32 = arith.constant 0 : i32
    %c0_i32_0 = arith.constant 0 : i32
    %c0_i32_1 = arith.constant 0 : i32
    return %c0_i32, %c0_i32_0 : i32, i32
  }
  func.func @transform_3(%arg0: i32) -> (i32, i32) {
    %c0_i32 = arith.constant 0 : i32
    %c0_i32_0 = arith.constant 0 : i32
    %c0_i32_1 = arith.constant 0 : i32
    return %c0_i32, %c0_i32_0 : i32, i32
  }
  func.func @transform_4(%arg0: i32) -> (i32, i32) {
    %c0_i32 = arith.constant 0 : i32
    %c0_i32_0 = arith.constant 0 : i32
    %c0_i32_1 = arith.constant 0 : i32
    return %c0_i32, %c0_i32_0 : i32, i32
  }
  func.func @transform_5(%arg0: i32) -> (i32, i32) {
    %c0_i32 = arith.constant 0 : i32
    %c0_i32_0 = arith.constant 0 : i32
    %c0_i32_1 = arith.constant 0 : i32
    return %c0_i32, %c0_i32_0 : i32, i32
  }
  func.func @transform_6(%arg0: i32) -> (i32, i32) {
    %c0_i32 = arith.constant 0 : i32
    %c0_i32_0 = arith.constant 0 : i32
    %c0_i32_1 = arith.constant 0 : i32
    return %c0_i32, %c0_i32_0 : i32, i32
  }
  func.func @transform_7(%arg0: i32) -> (i32, i32) {
    %c0_i32 = arith.constant 0 : i32
    %c0_i32_0 = arith.constant 0 : i32
    return %arg0, %c0_i32 : i32, i32
  }
}

</mosaic_0001>

<llo_original>
// kernel: tpu_custom_call.1
$region0: #{tpu_custom_call.1}
  #allocation0 [shape = 'u32[]', space=smem, size = 0x4, offset = 0x4, fixed_abs, tag = 'smem constant byte address 0x4 - core index']
  #allocation1 [shape = 'u32[144,128]{1,0:T(1,128)}', space=vmem, size = 0x12000, scoped, tag = 'internal scratch']
  #allocation2 [shape = 'f32[1,1]{1,0:T(1,128)S(1)}', space=vmem, size = 0x200, scoped, tag = 'scoped memory for tpu_custom_call.1']
  %s0 = inlined_call_operand.vmem [shape: f32[64,8], index: 0, kind: input, shape index: {}]
  %s1 = inlined_call_operand.vmem [shape: bf16[8,12], index: 1, kind: input, shape index: {}]
  %s2 = inlined_call_operand.vmem [shape: f32[1,12], index: 2, kind: input, shape index: {}]
  %s3 = inlined_call_operand.vmem [shape: bf16[12,16], index: 3, kind: input, shape index: {}]
  %s4 = inlined_call_operand.vmem [shape: f32[1,16], index: 4, kind: input, shape index: {}]
  %s5 = inlined_call_operand.vmem [shape: f32[1,16], index: 5, kind: input, shape index: {}]
  %s6 = inlined_call_operand.<no memory space> [shape: f32[1,1], index: 6, kind: input, shape index: {}]
  %s7 = inlined_call_operand.vmem [shape: f32[64,1], index: 7, kind: output, shape index: {}]
  %s8 = sld [smem:[#allocation0]]
  $region61: #{tpu_custom_call.1} parent=0
    _
  %s10 = ssub.s32 1, %s8
  %s11 = scalar_select 0, %s10, %s8
  %v12 = vstv %s6
  %13 = vst [vmem:[#allocation2] sm:$0x1] %v12
  loop: start=0, step=1, limit=6
  $region2: #{tpu_custom_call.1} parent=0 // loop_pre_header
    _
  $region3: #{tpu_custom_call.1} parent=0 // loop_header
    %s15 = sphi 0, %s19
    %p16 = scmp.ge.s32.totalorder %s15, 6
    %s25 = sphi 0, %s27
    %s28 = sphi 0, %s25
    %s29 = sphi 0, %s28
    %s45 = sphi 0, %s29
    %s49 = sphi 0, %s49
    %s51 = sphi 0, %s49
    %s52 = sphi 0, %s51
    %s66 = sphi 0, %s52
    %s70 = sphi 0, %s70
    %s72 = sphi 0, %s70
    %s73 = sphi 0, %s72
    %s87 = sphi 0, %s73
    %s91 = sphi 0, %s91
    %s93 = sphi 0, %s91
    %s94 = sphi 0, %s93
    %s108 = sphi 0, %s94
    %s112 = sphi 0, %s112
    %s114 = sphi 0, %s112
    %s115 = sphi 0, %s114
    %s129 = sphi 0, %s115
    %s133 = sphi 0, %s133
    %s135 = sphi 0, %s133
    %s136 = sphi 0, %s135
    %s150 = sphi 0, %s136
    %s154 = sphi 0, %s154
    %s156 = sphi 0, %s154
    %s157 = sphi 0, %s156
    %s171 = sphi 0, %s157
    %s177 = sphi 0, %s179
    %s180 = sphi 0, %s177
    %s181 = sphi 0, %s180
    %s197 = sphi 0, %s181
  $region4: #{tpu_custom_call.1} parent=0 // loop_header_branch
    %18 = sbr.rel (%p16) target = $region8
  $region5: #{tpu_custom_call.1} parent=0 // loop_body
    %s20 = ssub.s32 %s15, 1
    %s21 = ssub.s32 %s15, 2
    %s22 = sadd.s32 %s15, 1
    %s23 = ssub.s32 %s15, %s22
    %p24 = scmp.eq.s32.totalorder %s23, 0
    %s26 = sadd.s32 %s25, 1
    %s27 = scalar_select %p24, %s25, %s26
    %p30 = pneg %p24
    %p31 = scmp.eq.s32.totalorder %s15, 3
    %p32 = por %p30, %p31
    %p33 = scmp.ne.s32.totalorder %s25, %s28
    %p34 = scmp.eq.s32.totalorder %s15, 0
    %p35 = por %p33, %p34
    %p36 = scmp.ne.s32.totalorder %s25, %s28
    %p37 = scmp.eq.s32.totalorder %s20, 3
    %p38 = por %p36, %p37
    %p39 = scmp.ne.s32.totalorder %s28, %s29
    %p40 = scmp.eq.s32.totalorder %s20, 0
    %p41 = por %p39, %p40
    %p42 = scmp.ne.s32.totalorder %s28, %s29
    %p43 = scmp.eq.s32.totalorder %s21, 3
    %p44 = por %p42, %p43
    %p46 = scmp.ne.s32.totalorder %s29, %s45
    %p47 = scmp.eq.s32.totalorder %s21, 0
    %p48 = por %p46, %p47
    %s50 = sadd.s32 %s49, 1
    %p53 = scmp.eq.s32.totalorder %s15, 3
    %p54 = scmp.ne.s32.totalorder %s49, %s51
    %p55 = scmp.eq.s32.totalorder %s15, 0
    %p56 = por %p54, %p55
    %p57 = scmp.ne.s32.totalorder %s49, %s51
    %p58 = scmp.eq.s32.totalorder %s20, 3
    %p59 = por %p57, %p58
    %p60 = scmp.ne.s32.totalorder %s51, %s52
    %p61 = scmp.eq.s32.totalorder %s20, 0
    %p62 = por %p60, %p61
    %p63 = scmp.ne.s32.totalorder %s51, %s52
    %p64 = scmp.eq.s32.totalorder %s21, 3
    %p65 = por %p63, %p64
    %p67 = scmp.ne.s32.totalorder %s52, %s66
    %p68 = scmp.eq.s32.totalorder %s21, 0
    %p69 = por %p67, %p68
    %s71 = sadd.s32 %s70, 1
    %p74 = scmp.eq.s32.totalorder %s15, 3
    %p75 = scmp.ne.s32.totalorder %s70, %s72
    %p76 = scmp.eq.s32.totalorder %s15, 0
    %p77 = por %p75, %p76
    %p78 = scmp.ne.s32.totalorder %s70, %s72
    %p79 = scmp.eq.s32.totalorder %s20, 3
    %p80 = por %p78, %p79
    %p81 = scmp.ne.s32.totalorder %s72, %s73
    %p82 = scmp.eq.s32.totalorder %s20, 0
    %p83 = por %p81, %p82
    %p84 = scmp.ne.s32.totalorder %s72, %s73
    %p85 = scmp.eq.s32.totalorder %s21, 3
    %p86 = por %p84, %p85
    %p88 = scmp.ne.s32.totalorder %s73, %s87
    %p89 = scmp.eq.s32.totalorder %s21, 0
    %p90 = por %p88, %p89
    %s92 = sadd.s32 %s91, 1
    %p95 = scmp.eq.s32.totalorder %s15, 3
    %p96 = scmp.ne.s32.totalorder %s91, %s93
    %p97 = scmp.eq.s32.totalorder %s15, 0
    %p98 = por %p96, %p97
    %p99 = scmp.ne.s32.totalorder %s91, %s93
    %p100 = scmp.eq.s32.totalorder %s20, 3
    %p101 = por %p99, %p100
    %p102 = scmp.ne.s32.totalorder %s93, %s94
    %p103 = scmp.eq.s32.totalorder %s20, 0
    %p104 = por %p102, %p103
    %p105 = scmp.ne.s32.totalorder %s93, %s94
    %p106 = scmp.eq.s32.totalorder %s21, 3
    %p107 = por %p105, %p106
    %p109 = scmp.ne.s32.totalorder %s94, %s108
    %p110 = scmp.eq.s32.totalorder %s21, 0
    %p111 = por %p109, %p110
    %s113 = sadd.s32 %s112, 1
    %p116 = scmp.eq.s32.totalorder %s15, 3
    %p117 = scmp.ne.s32.totalorder %s112, %s114
    %p118 = scmp.eq.s32.totalorder %s15, 0
    %p119 = por %p117, %p118
    %p120 = scmp.ne.s32.totalorder %s112, %s114
    %p121 = scmp.eq.s32.totalorder %s20, 3
    %p122 = por %p120, %p121
    %p123 = scmp.ne.s32.totalorder %s114, %s115
    %p124 = scmp.eq.s32.totalorder %s20, 0
    %p125 = por %p123, %p124
    %p126 = scmp.ne.s32.totalorder %s114, %s115
    %p127 = scmp.eq.s32.totalorder %s21, 3
    %p128 = por %p126, %p127
    %p130 = scmp.ne.s32.totalorder %s115, %s129
    %p131 = scmp.eq.s32.totalorder %s21, 0
    %p132 = por %p130, %p131
    %s134 = sadd.s32 %s133, 1
    %p137 = scmp.eq.s32.totalorder %s15, 3
    %p138 = scmp.ne.s32.totalorder %s133, %s135
    %p139 = scmp.eq.s32.totalorder %s15, 0
    %p140 = por %p138, %p139
    %p141 = scmp.ne.s32.totalorder %s133, %s135
    %p142 = scmp.eq.s32.totalorder %s20, 3
    %p143 = por %p141, %p142
    %p144 = scmp.ne.s32.totalorder %s135, %s136
    %p145 = scmp.eq.s32.totalorder %s20, 0
    %p146 = por %p144, %p145
    %p147 = scmp.ne.s32.totalorder %s135, %s136
    %p148 = scmp.eq.s32.totalorder %s21, 3
    %p149 = por %p147, %p148
    %p151 = scmp.ne.s32.totalorder %s136, %s150
    %p152 = scmp.eq.s32.totalorder %s21, 0
    %p153 = por %p151, %p152
    %s155 = sadd.s32 %s154, 1
    %p158 = scmp.eq.s32.totalorder %s15, 3
    %p159 = scmp.ne.s32.totalorder %s154, %s156
    %p160 = scmp.eq.s32.totalorder %s15, 0
    %p161 = por %p159, %p160
    %p162 = scmp.ne.s32.totalorder %s154, %s156
    %p163 = scmp.eq.s32.totalorder %s20, 3
    %p164 = por %p162, %p163
    %p165 = scmp.ne.s32.totalorder %s156, %s157
    %p166 = scmp.eq.s32.totalorder %s20, 0
    %p167 = por %p165, %p166
    %p168 = scmp.ne.s32.totalorder %s156, %s157
    %p169 = scmp.eq.s32.totalorder %s21, 3
    %p170 = por %p168, %p169
    %p172 = scmp.ne.s32.totalorder %s157, %s171
    %p173 = scmp.eq.s32.totalorder %s21, 0
    %p174 = por %p172, %p173
    %s175 = ssub.s32 %s15, %s22
    %p176 = scmp.eq.s32.totalorder %s175, 0
    %s178 = sadd.s32 %s177, 1
    %s179 = scalar_select %p176, %s177, %s178
    %p182 = pneg %p176
    %p183 = scmp.eq.s32.totalorder %s15, 3
    %p184 = por %p182, %p183
    %p185 = scmp.ne.s32.totalorder %s177, %s180
    %p186 = scmp.eq.s32.totalorder %s15, 0
    %p187 = por %p185, %p186
    %p188 = scmp.ne.s32.totalorder %s177, %s180
    %p189 = scmp.eq.s32.totalorder %s20, 3
    %p190 = por %p188, %p189
    %p191 = scmp.ne.s32.totalorder %s180, %s181
    %p192 = scmp.eq.s32.totalorder %s20, 0
    %p193 = por %p191, %p192
    %p194 = scmp.ne.s32.totalorder %s180, %s181
    %p195 = scmp.eq.s32.totalorder %s21, 3
    %p196 = por %p194, %p195
    %p198 = scmp.ne.s32.totalorder %s181, %s197
    %p199 = scmp.eq.s32.totalorder %s21, 0
    %p200 = por %p198, %p199
    %p201 = scmp.le.s32.totalorder 1, %s15
    %p202 = scmp.lt.s32.totalorder %s15, 5
    %p203 = pnand %p201, %p202
    %p204 = pneg %p203
    // Predicated region
    $region9: #{tpu_custom_call.1} parent=5 // pred_check
      _
    $region10: #{tpu_custom_call.1} parent=5 // pred_check_branch
      %206 = sbr.rel (%p203) target = $region12
    $region11: #{tpu_custom_call.1} parent=5 // pred_region
      %s207 = ssub.s32 %s15, 1
      // Predicated region
      $region13: #{tpu_custom_call.1} parent=11 // pred_check
        %p208 = pneg %p62
      $region14: #{tpu_custom_call.1} parent=11 // pred_check_branch
        %210 = sbr.rel (%p208) target = $region16
      $region15: #{tpu_custom_call.1} parent=11 // pred_region
        _
      $region16: #{tpu_custom_call.1} parent=11 // pred_fallthru
        _
      // Predicated region
      $region17: #{tpu_custom_call.1} parent=11 // pred_check
        %p211 = pneg %p83
      $region18: #{tpu_custom_call.1} parent=11 // pred_check_branch
        %213 = sbr.rel (%p211) target = $region20
      $region19: #{tpu_custom_call.1} parent=11 // pred_region
        _
      $region20: #{tpu_custom_call.1} parent=11 // pred_fallthru
        _
      // Predicated region
      $region21: #{tpu_custom_call.1} parent=11 // pred_check
        %p214 = pneg %p104
      $region22: #{tpu_custom_call.1} parent=11 // pred_check_branch
        %216 = sbr.rel (%p214) target = $region24
      $region23: #{tpu_custom_call.1} parent=11 // pred_region
        _
      $region24: #{tpu_custom_call.1} parent=11 // pred_fallthru
        _
      // Predicated region
      $region25: #{tpu_custom_call.1} parent=11 // pred_check
        %p217 = pneg %p125
      $region26: #{tpu_custom_call.1} parent=11 // pred_check_branch
        %219 = sbr.rel (%p217) target = $region28
      $region27: #{tpu_custom_call.1} parent=11 // pred_region
        _
      $region28: #{tpu_custom_call.1} parent=11 // pred_fallthru
        _
      // Predicated region
      $region29: #{tpu_custom_call.1} parent=11 // pred_check
        %p220 = pneg %p146
      $region30: #{tpu_custom_call.1} parent=11 // pred_check_branch
        %222 = sbr.rel (%p220) target = $region32
      $region31: #{tpu_custom_call.1} parent=11 // pred_region
        _
      $region32: #{tpu_custom_call.1} parent=11 // pred_fallthru
        _
      // Predicated region
      $region33: #{tpu_custom_call.1} parent=11 // pred_check
        %p223 = pneg %p167
      $region34: #{tpu_custom_call.1} parent=11 // pred_check_branch
        %225 = sbr.rel (%p223) target = $region36
      $region35: #{tpu_custom_call.1} parent=11 // pred_region
        _
      $region36: #{tpu_custom_call.1} parent=11 // pred_fallthru
        _
    $region12: #{tpu_custom_call.1} parent=5 // pred_fallthru
      _
    %p226 = scmp.lt.s32.totalorder %s15, 4
    // Predicated region
    $region37: #{tpu_custom_call.1} parent=5 // pred_check
      %p227 = pneg %p226
    $region38: #{tpu_custom_call.1} parent=5 // pred_check_branch
      %229 = sbr.rel (%p227) target = $region40
    $region39: #{tpu_custom_call.1} parent=5 // pred_region
      // Predicated region
      $region41: #{tpu_custom_call.1} parent=39 // pred_check
        %p230 = pneg %p35
      $region42: #{tpu_custom_call.1} parent=39 // pred_check_branch
        %232 = sbr.rel (%p230) target = $region44
      $region43: #{tpu_custom_call.1} parent=39 // pred_region
        %s233 = smul.u32 2, %s15
        %p234 = scmp.lt.s32.totalorder %s233, 7
        %s235 = scalar_select %p234, %s233, 7
        %s236 = smul.addr %s235, 8
        %s237 = scalar_lea.vmem %s0, %s236
        %s238 = smul.u32 2, %s15
      $region44: #{tpu_custom_call.1} parent=39 // pred_fallthru
        _
    $region40: #{tpu_custom_call.1} parent=5 // pred_fallthru
      _
    %p239 = scmp.le.s32.totalorder 1, %s15
    %p240 = scmp.lt.s32.totalorder %s15, 5
    %p241 = pnand %p239, %p240
    %p242 = pneg %p241
    // Predicated region
    $region45: #{tpu_custom_call.1} parent=5 // pred_check
      _
    $region46: #{tpu_custom_call.1} parent=5 // pred_check_branch
      %244 = sbr.rel (%p241) target = $region48
    $region47: #{tpu_custom_call.1} parent=5 // pred_region
      %s245 = ssub.s32 %s15, 1
      %s246 = smul.u32 2, %s20
      %p247 = scmp.lt.s32.totalorder %s246, 7
      %s248 = scalar_select %p247, %s246, 7
      %s249 = smul.addr %s248, 8
      %s250 = scalar_lea.vmem %s0, %s249
      %p251 = pneg %p41
      %p252 = pneg %p38
      %p253 = pneg %p62
      %p254 = pneg %p59
      %p255 = pneg %p83
      %p256 = pneg %p80
      %p257 = pneg %p104
      %p258 = pneg %p101
      %p259 = pneg %p125
      %p260 = pneg %p122
      %p261 = pneg %p146
      %p262 = pneg %p143
      %p263 = pneg %p167
      %p264 = pneg %p164
      %p265 = pneg %p193
      %p266 = pneg %p190
      %s267 = smul.u32 2, %s20
      %p268 = scmp.lt.s32.totalorder %s267, 7
      %s269 = scalar_select %p268, %s267, 7
      %s270 = smul.addr %s269, 8
      %s271 = scalar_lea.vmem %s7, %s270
      %s272 = smul.u32 2, %s20
      %p273 = scmp.lt.s32.totalorder %s272, 7
      %s274 = scalar_select %p273, %s272, 7
      %s275 = smul.addr %s274, 8
      %s276 = scalar_lea.vmem %s0, %s275
      %s277 = smul.u32 2, %s20
      %s278 = smul.u32 2, %s20
      %p279 = scmp.lt.s32.totalorder %s278, 7
      %s280 = scalar_select %p279, %s278, 7
      %s281 = smul.addr %s280, 8
      %s282 = scalar_lea.vmem %s7, %s281
      %s283 = smul.u32 2, %s20
      %v285 = vld [vmem:[%s276] sm:$0xff]
      %v286 = vld [vmem:[%s276 + $0x8] sm:$0xff]
      %v287 = vpack.c.bf16 %v286, %v285
      %v288 = vld [vmem:[%s1] sm:$0xf]
      %v289 = vld [vmem:[%s2] sm:$0x1]
      %v291 = vlaneseq
      %v292 = vshrl.u32 %v291, 7
      %v293 = vsub.s32 0, %v292
      %v294 = vrot.slane %v289, %v293
      %vm296 = vcmask 64512
      %v298 = vsel %vm296, %v287, 0
      %vm300 = vcmask 1043456
      %v302 = vsel %vm300, %v288, 0
      %304 = vmatprep.subr.bf16.mxu0 0
      %305 = vmatpush1.bf16.msra.mxu0 %v302
      %306 = vmatprep.subr.bf16.mxu0 0
      %307 = vmatpush1.bf16.msra.mxu0 0
      %308 = vmatprep.subr.bf16.mxu0 0
      %309 = vmatpush1.bf16.msra.mxu0 0
      %310 = vmatprep.subr.bf16.mxu0 0
      %311 = vmatpush1.bf16.msra.mxu0 0
      %312 = vmatprep.subr.bf16.mxu0 0
      %313 = vmatpush1.bf16.msra.mxu0 0
      %314 = vmatprep.subr.bf16.mxu0 0
      %315 = vmatpush1.bf16.msra.mxu0 0
      %316 = vmatprep.subr.bf16.mxu0 0
      %317 = vmatpush1.bf16.msra.mxu0 0
      %318 = vmatprep.subr.bf16.mxu0 0
      %319 = vmatpush1.bf16.msra.mxu0 0
      %320 = vmatprep.subr.bf16.mxu0 0
      %321 = vmatpush1.bf16.msra.mxu0 0
      %322 = vmatprep.subr.bf16.mxu0 0
      %323 = vmatpush1.bf16.msra.mxu0 0
      %324 = vmatprep.subr.bf16.mxu0 0
      %325 = vmatpush1.bf16.msra.mxu0 0
      %326 = vmatprep.subr.bf16.mxu0 0
      %327 = vmatpush1.bf16.msra.mxu0 0
      %328 = vmatprep.subr.bf16.mxu0 0
      %329 = vmatpush1.bf16.msra.mxu0 0
      %330 = vmatprep.subr.bf16.mxu0 0
      %331 = vmatpush1.bf16.msra.mxu0 0
      %332 = vmatprep.subr.bf16.mxu0 0
      %333 = vmatpush1.bf16.msra.mxu0 0
      %334 = vmatprep.subr.bf16.mxu0 0
      %335 = vmatpush1.bf16.msra.mxu0 0
      %336 = vmatprep.mubr.bf16.mxu0 0
      %337 = vmatmul.mubr.bf16.gmra.mrb[0].mxu0 %v298
      %v338 = vpop.f32.mrb[0].mxu0
      %v339 = vadd.f32 %v294, %v338
      %v340 = vpop.f32.mrb[0].mxu0
      %v341 = vpop.f32.mrb[0].mxu0
      %v342 = vadd.f32 %v294, %v341
      %v343 = vpop.f32.mrb[0].mxu0
      %344 = vdwg.mxu0
      %v345 = vmax.f32 %v339, 0.0
      %v346 = vmax.f32 %v342, 0.0
      %v347 = vpack.c.bf16 %v346, %v345
      %v348 = vld [vmem:[%s3] sm:$0xf]
      %v349 = vld [vmem:[%s3 + $0x4] sm:$0x3]
      %v350 = vld [vmem:[%s4] sm:$0x1]
      %v352 = vlaneseq
      %v353 = vshrl.u32 %v352, 7
      %v354 = vsub.s32 0, %v353
      %v355 = vrot.slane %v350, %v354
      %v359 = vunpack.c.l.b16 %v348
      %v360 = vunpack.c.l.b16 %v349
      %v361 = vpack.c.b16 %v360, %v359
      %vm362 = vcmask 97280
      %v364 = vsel %vm362, %v347, 0
      %vm366 = vcmask 1045504
      %v368 = vsel %vm366, %v361, 0
      %370 = vmatprep.subr.bf16.mxu0 0
      %371 = vmatpush1.bf16.msra.mxu0 %v368
      %372 = vmatprep.subr.bf16.mxu0 0
      %373 = vmatpush1.bf16.msra.mxu0 0
      %374 = vmatprep.subr.bf16.mxu0 0
      %375 = vmatpush1.bf16.msra.mxu0 0
      %376 = vmatprep.subr.bf16.mxu0 0
      %377 = vmatpush1.bf16.msra.mxu0 0
      %378 = vmatprep.subr.bf16.mxu0 0
      %379 = vmatpush1.bf16.msra.mxu0 0
      %380 = vmatprep.subr.bf16.mxu0 0
      %381 = vmatpush1.bf16.msra.mxu0 0
      %382 = vmatprep.subr.bf16.mxu0 0
      %383 = vmatpush1.bf16.msra.mxu0 0
      %384 = vmatprep.subr.bf16.mxu0 0
      %385 = vmatpush1.bf16.msra.mxu0 0
      %386 = vmatprep.subr.bf16.mxu0 0
      %387 = vmatpush1.bf16.msra.mxu0 0
      %388 = vmatprep.subr.bf16.mxu0 0
      %389 = vmatpush1.bf16.msra.mxu0 0
      %390 = vmatprep.subr.bf16.mxu0 0
      %391 = vmatpush1.bf16.msra.mxu0 0
      %392 = vmatprep.subr.bf16.mxu0 0
      %393 = vmatpush1.bf16.msra.mxu0 0
      %394 = vmatprep.subr.bf16.mxu0 0
      %395 = vmatpush1.bf16.msra.mxu0 0
      %396 = vmatprep.subr.bf16.mxu0 0
      %397 = vmatpush1.bf16.msra.mxu0 0
      %398 = vmatprep.subr.bf16.mxu0 0
      %399 = vmatpush1.bf16.msra.mxu0 0
      %400 = vmatprep.subr.bf16.mxu0 0
      %401 = vmatpush1.bf16.msra.mxu0 0
      %402 = vmatprep.mubr.bf16.mxu0 0
      %403 = vmatmul.mubr.bf16.gmra.mrb[0].mxu0 %v364
      %v404 = vpop.f32.mrb[0].mxu0
      %v405 = vadd.f32 %v355, %v404
      %v406 = vpop.f32.mrb[0].mxu0
      %v407 = vpop.f32.mrb[0].mxu0
      %v408 = vadd.f32 %v355, %v407
      %v409 = vpop.f32.mrb[0].mxu0
      %410 = vdwg.mxu0
      %v411 = vmax.f32 %v405, 0.0
      %v412 = vmax.f32 %v408, 0.0
      %v413 = vld [vmem:[%s5] sm:$0x1]
      %v415 = vlaneseq
      %v416 = vshrl.u32 %v415, 7
      %v417 = vsub.s32 0, %v416
      %v418 = vrot.slane %v413, %v417
      %v420 = vmul.f32 %v411, %v418
      %v421 = vmul.f32 %v412, %v418
      %vm422 = vcmask 130048
      %v423 = vsel %vm422, %v420, 0.0
      %424 = vadd.xlane.f32.xlu0 %v423
      %v425 = vpop.xlane.xlu0 %424
      %v426 = vsel %vm422, %v421, 0.0
      %427 = vadd.xlane.f32.xlu0 %v426
      %v428 = vpop.xlane.xlu0 %427
      %v429 = vld [vmem:[#allocation2] sm:$0x1]
      %v431 = vlaneseq
      %v432 = vshrl.u32 %v431, 7
      %v433 = vsub.s32 0, %v432
      %v434 = vrot.slane %v429, %v433
      %v436 = vadd.f32 %v425, %v434
      %v437 = vadd.f32 %v428, %v434
      %v438 = vxor.u32 %v436, 2147483648
      %v439 = vxor.u32 %v437, 2147483648
      %v440 = vmul.f32 %v438, 1.442695
      %v441 = vpow.pop %v440
      %v442 = vmul.f32 %v439, 1.442695
      %v443 = vpow.pop %v442
      %v444 = vadd.f32 %v441, 1.0
      %v445 = vadd.f32 %v443, 1.0
      %v446 = vrcp.pop %v444
      %v447 = vmul.f32 1.0, %v446
      %v448 = vrcp.pop %v445
      %v449 = vmul.f32 1.0, %v448
      %vm450 = vcmask 7168
      %451 = vst.msk [vmem:[%s282] sm:$0xff] %vm450, %v447
      %452 = vst.msk [vmem:[%s282 + $0x8] sm:$0xff] %vm450, %v449
      %s453 = smul.u32 2, %s20
      %p454 = scmp.lt.s32.totalorder %s453, 7
      %s455 = scalar_select %p454, %s453, 7
      %s456 = smul.addr %s455, 8
      %s457 = scalar_lea.vmem %s7, %s456
      // Predicated region
      $region49: #{tpu_custom_call.1} parent=47 // pred_check
        %p458 = pneg %p190
      $region50: #{tpu_custom_call.1} parent=47 // pred_check_branch
        %460 = sbr.rel (%p458) target = $region52
      $region51: #{tpu_custom_call.1} parent=47 // pred_region
        %s461 = smul.u32 2, %s20
      $region52: #{tpu_custom_call.1} parent=47 // pred_fallthru
        _
    $region48: #{tpu_custom_call.1} parent=5 // pred_fallthru
      _
    %p462 = scmp.le.s32.totalorder 2, %s15
    // Predicated region
    $region53: #{tpu_custom_call.1} parent=5 // pred_check
      %p463 = pneg %p462
    $region54: #{tpu_custom_call.1} parent=5 // pred_check_branch
      %465 = sbr.rel (%p463) target = $region56
    $region55: #{tpu_custom_call.1} parent=5 // pred_region
      %s466 = ssub.s32 %s15, 2
      // Predicated region
      $region57: #{tpu_custom_call.1} parent=55 // pred_check
        %p467 = pneg %p196
      $region58: #{tpu_custom_call.1} parent=55 // pred_check_branch
        %469 = sbr.rel (%p467) target = $region60
      $region59: #{tpu_custom_call.1} parent=55 // pred_region
        %s470 = smul.u32 2, %s21
        %p471 = scmp.lt.s32.totalorder %s470, 7
        %s472 = scalar_select %p471, %s470, 7
        %s473 = smul.addr %s472, 8
        %s474 = scalar_lea.vmem %s7, %s473
      $region60: #{tpu_custom_call.1} parent=55 // pred_fallthru
        _
    $region56: #{tpu_custom_call.1} parent=5 // pred_fallthru
      _
  $region6: #{tpu_custom_call.1} parent=0 // loop_footer
    %s19 = sadd.s32 1, %s15
  $region7: #{tpu_custom_call.1} parent=0 // loop_footer_branch
    %14 = sbr.rel target = $region3
  $region8: #{tpu_custom_call.1} parent=0 // loop_exit
    _

</llo_original>
